<compile_context>
chip_gen: v7x
topology: tpu7x:2x2x1
jax: 0.10.0
libtpu: 0.0.40
codegen_flags: <defaults>
</compile_context>

<pallas_src>
import functools

import numpy as np
import jax
import jax.numpy as jnp
from jax import lax
from jax.experimental import pallas as pl
from jax.experimental.pallas import tpu as pltpu

XIC_KEY = "XIC"
MAX_ADDS = 5   # np.random.randint(1, 6) -> num_adds in [1, 5]
ADD_PAD = 8    # appended block padded to one full sublane tile


def _round_up(x, m):
    return (x + m - 1) // m * m


def _add_transitions_kernel(sel_ref, xic_ref, out_ref):
    """Per-sample body (grid axis = batch).

    sel_ref : (ADD_PAD, Np)        f32 VMEM  scaled one-hot select rows
                                             (sel[i, k_i] = scale_i, else 0)
    xic_ref : (C, Np, T)               VMEM  original XIC (N padded to mult. of 8)
    out_ref : (C, Np + ADD_PAD, T)     VMEM  [original rows | 8 appended rows]
    """
    c_dim = xic_ref.shape[0]
    n = xic_ref.shape[1]

    # Bulk copy of the original transitions: one aligned full-width store.
    out_ref[:, :n, :] = xic_ref[...]

    # Appended rows for all i at once:
    #   (ADD_PAD, Np) @ (Np, T) -> (ADD_PAD, T)   per channel (C is tiny/static)
    # Replaces MAX_ADDS dynamic sublane gathers + masked 1-row stores with one
    # matmul and one aligned 8-sublane block store per channel.
    sel = sel_ref[...]
    for c in range(c_dim):  # static unroll, C ~ 2
        out_ref[c, n:, :] = jnp.dot(
            sel,
            xic_ref[c],
            precision=jax.lax.Precision.HIGHEST,   # keep full f32 fidelity
            preferred_element_type=jnp.float32,
        ).astype(out_ref.dtype)


def _batched_pallas(xics, sels):
    """xics: (B, C, Np, T), sels: (B, ADD_PAD, Np) -> (B, C, Np + ADD_PAD, T)."""
    B, C, Np, T = xics.shape
    return pl.pallas_call(
        _add_transitions_kernel,
        out_shape=jax.ShapeDtypeStruct((B, C, Np + ADD_PAD, T), xics.dtype),
        grid=(B,),
        in_specs=[
            pl.BlockSpec((None, ADD_PAD, Np), lambda b: (b, 0, 0)),       # sel
            pl.BlockSpec((None, C, Np, T), lambda b: (b, 0, 0, 0)),       # xic
        ],
        out_specs=pl.BlockSpec((None, C, Np + ADD_PAD, T), lambda b: (b, 0, 0, 0)),
        compiler_params=pltpu.CompilerParams(
            # v7x: batch axis is split across the 2 TensorCores.
            dimension_semantics=("parallel",),
        ),
    )(sels, xics)


@functools.partial(jax.jit, static_argnames=("num_adds",))
def _augment_one(xic, sel, num_adds):
    """xic: (C, N, T); sel: (ADD_PAD, Np). Returns (C, N + num_adds, T).

    Pad, kernel, and final slice are all fused in one jit dispatch.
    """
    _, N, _ = xic.shape
    Np = _round_up(N, 8)
    xic_p = xic if Np == N else jnp.pad(xic, ((0, 0), (0, Np - N), (0, 0)))
    full = _batched_pallas(xic_p[None], sel[None])[0]
    if Np == N:
        return lax.slice_in_dim(full, 0, N + num_adds, axis=1)
    orig = lax.slice_in_dim(full, 0, N, axis=1)
    added = lax.slice_in_dim(full, Np, Np + num_adds, axis=1)
    return lax.concatenate([orig, added], dimension=1)


@jax.jit
def _augment_batch_padded(xics, sels):
    """One kernel launch for a whole stacked batch; returns padded outputs."""
    return _batched_pallas(xics, sels)


class AddTransitions:
    """JAX/Pallas port of the deepmrm AddTransitions augmentation."""

    def __init__(self, p=0.5, seed=0):
        self.p = p
        self._rng = np.random.default_rng(seed)

    # ---- host RNG: mirrors the PyTorch module's torch.rand / np.random ----
    def _passes_gates(self, sample):
        if self._rng.uniform() > self.p:
            return False
        if sample["replicate_id"] == 0:
            return False
        if sample["manual_quality"] != 1:
            return False
        return True

    def _draw(self, num_trans, n_pad):
        num_adds = int(self._rng.integers(1, 6))                       # [1, 5]
        k = self._rng.integers(0, num_trans, size=num_adds)
        scales = self._rng.uniform(0.33, 3.0, size=num_adds).astype(np.float32)
        sel = np.zeros((ADD_PAD, n_pad), np.float32)   # scaled one-hot rows
        sel[np.arange(num_adds), k] = scales
        return sel, num_adds, k, scales

    # ---- single-sample path (B=1 through the batched kernel) --------------
    def __call__(self, sample):
        if not self._passes_gates(sample):
            return sample
        xic = jnp.asarray(sample[XIC_KEY])
        num_trans = xic.shape[1]
        Np = _round_up(num_trans, 8)
        sel, num_adds, k, scales = self._draw(num_trans, Np)
        sample[XIC_KEY] = _augment_one(xic, jnp.asarray(sel), num_adds=num_adds)
        sample["_added_k"] = k               # kept for verification only
        sample["_added_scales"] = scales
        return sample

    # ---- batched path: ONE pallas_call for all eligible samples -----------
    def batch_call(self, samples):
        """All eligible samples must share the same XIC shape (C, N, T)."""
        elig = [i for i, s in enumerate(samples) if self._passes_gates(s)]
        if not elig:
            return samples
        x0 = np.asarray(samples[elig[0]][XIC_KEY])
        C, N, T = x0.shape
        Np = _round_up(N, 8)
        xics = np.zeros((len(elig), C, Np, T), x0.dtype)
        sels = np.zeros((len(elig), ADD_PAD, Np), np.float32)
        meta = []
        for j, i in enumerate(elig):
            x = np.asarray(samples[i][XIC_KEY])
            assert x.shape == (C, N, T), "batch_call requires a uniform XIC shape"
            xics[j, :, :N, :] = x
            sel, num_adds, k, scales = self._draw(N, Np)
            sels[j] = sel
            meta.append((num_adds, k, scales))
        # One H2D transfer pair + one kernel launch for the whole batch; the
        # per-sample trailing slices below are zero-copy numpy views of a
        # single device fetch (the original module returns numpy as well).
        full = np.asarray(
            jax.block_until_ready(
                _augment_batch_padded(jnp.asarray(xics), jnp.asarray(sels))
            )
        )
        for j, i in enumerate(elig):
            num_adds, k, scales = meta[j]
            if Np == N:
                new_x = full[j, :, : N + num_adds, :]
            else:
                new_x = np.concatenate(
                    [full[j, :, :N, :], full[j, :, Np : Np + num_adds, :]], axis=1
                )
            samples[i][XIC_KEY] = new_x
            samples[i]["_added_k"] = k
            samples[i]["_added_scales"] = scales
        return samples


if __name__ == "__main__":
    key = jax.random.PRNGKey(0)

    # Small XIC: (channels=2 [light/heavy], num_trans=8, time=128)
    C, N, T = 2, 8, 128

    def ref_new_xic(xic_np, k, scales):
        na = len(k)
        ref = np.zeros((C, N + na, T), dtype=xic_np.dtype)
        ref[:, :N, :] = xic_np
        for i in range(na):
            ref[:, N + i, :] = xic_np[:, k[i], :] * scales[i]
        return ref

    aug = AddTransitions(p=1.0, seed=0)  # p=1 forces the augmentation branch

    # ---- single-sample path -------------------------------------------------
    xic = jax.random.uniform(key, (C, N, T), dtype=jnp.float32)
    sample = {XIC_KEY: xic, "replicate_id": 1, "manual_quality": 1}
    out = aug(dict(sample))
    new_xic = np.asarray(jax.block_until_ready(out[XIC_KEY]))
    ref = ref_new_xic(np.asarray(xic), out["_added_k"], out["_added_scales"])
    assert new_xic.shape == ref.shape
    assert np.allclose(new_xic, ref, rtol=1e-5, atol=1e-6)

    # ---- batched path: 4 samples, ONE pallas_call ---------------------------
    B = 4
    keys = jax.random.split(key, B)
    xics = [jax.random.uniform(keys[b], (C, N, T), dtype=jnp.float32) for b in range(B)]
    samples = [
        {XIC_KEY: xics[b], "replicate_id": 1, "manual_quality": 1} for b in range(B)
    ]
    out_batch = aug.batch_call([dict(s) for s in samples])
    for b in range(B):
        s_out = out_batch[b]
        assert "_added_k" in s_out  # p=1.0 and metadata gates pass -> augmented
        got = np.asarray(s_out[XIC_KEY])
        ref = ref_new_xic(
            np.asarray(xics[b]), s_out["_added_k"], s_out["_added_scales"]
        )
        assert got.shape == ref.shape
        assert np.allclose(got, ref, rtol=1e-5, atol=1e-6)

    print("KERNEL_OK")
</pallas_src>

<mosaic_0001>
module attributes {stable_mosaic.version = 11 : i64} {
  func.func @_add_transitions_kernel(%arg0: i32, %arg1: memref<1x8x8xf32, #tpu.memory_space<vmem>>, %arg2: memref<1x2x8x128xf32, #tpu.memory_space<vmem>>, %arg3: memref<1x2x16x128xf32, #tpu.memory_space<vmem>>) attributes {dimension_semantics = [#tpu.dimension_semantics<parallel>], iteration_bounds = array<i64: 1>, scalar_prefetch = 0 : i64, scratch_operands = 0 : i64, tpu.core_type = #tpu.core_type<tc>, window_params = [{transform_indices = @transform_0, window_bounds = array<i64: 1, 8, 8>}, {transform_indices = @transform_1, window_bounds = array<i64: 1, 2, 8, 128>}, {transform_indices = @transform_2, window_bounds = array<i64: 1, 2, 16, 128>}]} {
    %c0 = arith.constant 0 : index
    %c0_0 = arith.constant 0 : index
    %c0_1 = arith.constant 0 : index
    %c0_2 = arith.constant 0 : index
    %0 = vector.load %arg2[%c0, %c0_0, %c0_1, %c0_2] : memref<1x2x8x128xf32, #tpu.memory_space<vmem>>, vector<1x2x8x128xf32>
    %1 = vector.shape_cast %0 : vector<1x2x8x128xf32> to vector<2x8x128xf32>
    %c0_3 = arith.constant 0 : index
    %c0_4 = arith.constant 0 : index
    %c0_5 = arith.constant 0 : index
    %c0_6 = arith.constant 0 : index
    %2 = vector.load %arg3[%c0_3, %c0_4, %c0_5, %c0_6] : memref<1x2x16x128xf32, #tpu.memory_space<vmem>>, vector<1x2x8x128xf32>
    %3 = vector.shape_cast %2 : vector<1x2x8x128xf32> to vector<2x8x128xf32>
    %4 = vector.shape_cast %1 : vector<2x8x128xf32> to vector<1x2x8x128xf32>
    tpu.vector_store %arg3[%c0_3, %c0_4, %c0_5, %c0_6], %4 {strides = array<i32>} : memref<1x2x16x128xf32, #tpu.memory_space<vmem>>, vector<1x2x8x128xf32>,
    %c0_7 = arith.constant 0 : index
    %c0_8 = arith.constant 0 : index
    %c0_9 = arith.constant 0 : index
    %5 = vector.load %arg1[%c0_7, %c0_8, %c0_9] : memref<1x8x8xf32, #tpu.memory_space<vmem>>, vector<1x8x8xf32>
    %6 = vector.shape_cast %5 : vector<1x8x8xf32> to vector<8x8xf32>
    %c0_10 = arith.constant 0 : index
    %c0_11 = arith.constant 0 : index
    %c0_12 = arith.constant 0 : index
    %c0_13 = arith.constant 0 : index
    %7 = vector.load %arg2[%c0_10, %c0_11, %c0_12, %c0_13] : memref<1x2x8x128xf32, #tpu.memory_space<vmem>>, vector<1x1x8x128xf32>
    %8 = vector.shape_cast %7 : vector<1x1x8x128xf32> to vector<8x128xf32>
    %cst = arith.constant dense<0.000000e+00> : vector<8x128xf32>
    %9 = tpu.matmul %6, %8, %cst {dimension_numbers = #tpu.dot_dimension_numbers<[1], [0], [0], [1], [0, 0, 1, 1], [], []>, precision = #tpu.contract_precision<fp32>} : vector<8x8xf32>, vector<8x128xf32>, vector<8x128xf32> -> vector<8x128xf32>
    %c0_14 = arith.constant 0 : index
    %c0_15 = arith.constant 0 : index
    %c8 = arith.constant 8 : index
    %c0_16 = arith.constant 0 : index
    %10 = vector.load %arg3[%c0_14, %c0_15, %c8, %c0_16] : memref<1x2x16x128xf32, #tpu.memory_space<vmem>>, vector<1x1x8x128xf32>
    %11 = vector.shape_cast %10 : vector<1x1x8x128xf32> to vector<8x128xf32>
    %12 = vector.shape_cast %9 : vector<8x128xf32> to vector<1x1x8x128xf32>
    tpu.vector_store %arg3[%c0_14, %c0_15, %c8, %c0_16], %12 {strides = array<i32>} : memref<1x2x16x128xf32, #tpu.memory_space<vmem>>, vector<1x1x8x128xf32>,
    %c0_17 = arith.constant 0 : index
    %c1 = arith.constant 1 : index
    %c0_18 = arith.constant 0 : index
    %c0_19 = arith.constant 0 : index
    %13 = vector.load %arg2[%c0_17, %c1, %c0_18, %c0_19] : memref<1x2x8x128xf32, #tpu.memory_space<vmem>>, vector<1x1x8x128xf32>
    %14 = vector.shape_cast %13 : vector<1x1x8x128xf32> to vector<8x128xf32>
    %cst_20 = arith.constant dense<0.000000e+00> : vector<8x128xf32>
    %15 = tpu.matmul %6, %14, %cst_20 {dimension_numbers = #tpu.dot_dimension_numbers<[1], [0], [0], [1], [0, 0, 1, 1], [], []>, precision = #tpu.contract_precision<fp32>} : vector<8x8xf32>, vector<8x128xf32>, vector<8x128xf32> -> vector<8x128xf32>
    %c0_21 = arith.constant 0 : index
    %c1_22 = arith.constant 1 : index
    %c8_23 = arith.constant 8 : index
    %c0_24 = arith.constant 0 : index
    %16 = vector.load %arg3[%c0_21, %c1_22, %c8_23, %c0_24] : memref<1x2x16x128xf32, #tpu.memory_space<vmem>>, vector<1x1x8x128xf32>
    %17 = vector.shape_cast %16 : vector<1x1x8x128xf32> to vector<8x128xf32>
    %18 = vector.shape_cast %15 : vector<8x128xf32> to vector<1x1x8x128xf32>
    tpu.vector_store %arg3[%c0_21, %c1_22, %c8_23, %c0_24], %18 {strides = array<i32>} : memref<1x2x16x128xf32, #tpu.memory_space<vmem>>, vector<1x1x8x128xf32>,
    return
  }
  func.func @transform_0(%arg0: i32) -> (i32, i32, i32) {
    %c0_i32 = arith.constant 0 : i32
    %c0_i32_0 = arith.constant 0 : i32
    %c0_i32_1 = arith.constant 0 : i32
    return %arg0, %c0_i32, %c0_i32_0 : i32, i32, i32
  }
  func.func @transform_1(%arg0: i32) -> (i32, i32, i32, i32) {
    %c0_i32 = arith.constant 0 : i32
    %c0_i32_0 = arith.constant 0 : i32
    %c0_i32_1 = arith.constant 0 : i32
    %c0_i32_2 = arith.constant 0 : i32
    return %arg0, %c0_i32, %c0_i32_0, %c0_i32_1 : i32, i32, i32, i32
  }
  func.func @transform_2(%arg0: i32) -> (i32, i32, i32, i32) {
    %c0_i32 = arith.constant 0 : i32
    %c0_i32_0 = arith.constant 0 : i32
    %c0_i32_1 = arith.constant 0 : i32
    %c0_i32_2 = arith.constant 0 : i32
    return %arg0, %c0_i32, %c0_i32_0, %c0_i32_1 : i32, i32, i32, i32
  }
}

</mosaic_0001>

<llo_original>
// kernel: _augment_one.1
$region0: #{_augment_one.1}
  #allocation0 [shape = 'u32[]', space=smem, size = 0x4, offset = 0x4, fixed_abs, tag = 'smem constant byte address 0x4 - core index']
  #allocation1 [shape = 'u32[144,128]{1,0:T(1,128)}', space=vmem, size = 0x12000, scoped, tag = 'internal scratch']
  %s0 = inlined_call_operand.vmem [shape: f32[1,8,8], index: 0, kind: input, shape index: {}]
  %s1 = inlined_call_operand.hbm [shape: f32[1,2,8,128], index: 1, kind: input, shape index: {}]
  %s2 = inlined_call_operand.vmem [shape: f32[1,2,16,128], index: 2, kind: output, shape index: {}]
  %s3 = sld [smem:[#allocation0]]
  $region22: #{_augment_one.1} parent=0
    _
  %s5 = ssub.s32 1, %s3
  %s6 = scalar_select 0, %s5, %s3
  $region1: #{_augment_one.1} parent=0
    #allocation2 [shape = 'u8[8192]{0}', space=vmem, size = 0x2000, scoped, tag = 'input window, operand 1, single buffered']
    #allocation3 [shape = 's32[1]{0}', space=sflag, size = 0x4, scoped, tag = 'scoped memory for _augment_one.1']
    %7 = vsyncpa [#allocation3], 0
    // Predicated region
    $region2: #{_augment_one.1} parent=1 // pred_check
      _
    $region3: #{_augment_one.1} parent=1 // pred_check_branch
      %9 = sbr.rel (0) target = $region5
    $region4: #{_augment_one.1} parent=1 // pred_region
      _
    $region5: #{_augment_one.1} parent=1 // pred_fallthru
      _
    // Predicated region
    $region6: #{_augment_one.1} parent=1 // pred_check
      _
    $region7: #{_augment_one.1} parent=1 // pred_check_branch
      %11 = sbr.rel (0) target = $region9
    $region8: #{_augment_one.1} parent=1 // pred_region
      %s13 = ssub.s32 256, 256
      %14 = vsyncadd [#allocation3], %s13
      %s15 = sshll.u32 [#allocation2], 4
      %s16 = int_to_ptr.vmem [resolvable:$true] %s15
      %21 = dma.hbm_to_vmem [thread:$0]  %s1, 256, %s16, [#allocation3], 128, 128, 8
    $region9: #{_augment_one.1} parent=1 // pred_fallthru
      _
    // Predicated region
    $region10: #{_augment_one.1} parent=1 // pred_check
      _
    $region11: #{_augment_one.1} parent=1 // pred_check_branch
      %23 = sbr.rel (0) target = $region13
    $region12: #{_augment_one.1} parent=1 // pred_region
      %24 = dma.done [#allocation3], 256
    $region13: #{_augment_one.1} parent=1 // pred_fallthru
      _
    %v25 = vld [vmem:[#allocation2] sm:$0xff]
    %v26 = vld [vmem:[#allocation2 + $0x8] sm:$0xff]
    %27 = vst [vmem:[%s2] sm:$0xff] %v25
    %28 = vst [vmem:[%s2 + $0x10] sm:$0xff] %v26
    %v29 = vld [vmem:[%s0] sm:$0xff]
    %v30 = vld [vmem:[#allocation2] sm:$0xff]
    %vm31 = vcmask 64512
    %v33 = vsel %vm31, %v29, 0
    %35 = vmatprep.subr.mxu0 0.0
    %v36 = vand.u32 %v30, 4294901760
    %37 = vmatpush1.msra.mxu0 %v36
    %38 = vmatprep.subr.mxu0 0.0
    %39 = vmatpush1.msra.mxu0 0.0
    %40 = vmatprep.subr.mxu0 0.0
    %41 = vmatpush1.msra.mxu0 0.0
    %42 = vmatprep.subr.mxu0 0.0
    %43 = vmatpush1.msra.mxu0 0.0
    %44 = vmatprep.subr.mxu0 0.0
    %45 = vmatpush1.msra.mxu0 0.0
    %46 = vmatprep.subr.mxu0 0.0
    %47 = vmatpush1.msra.mxu0 0.0
    %48 = vmatprep.subr.mxu0 0.0
    %49 = vmatpush1.msra.mxu0 0.0
    %50 = vmatprep.subr.mxu0 0.0
    %51 = vmatpush1.msra.mxu0 0.0
    %52 = vmatprep.subr.mxu0 0.0
    %53 = vmatpush1.msra.mxu0 0.0
    %54 = vmatprep.subr.mxu0 0.0
    %55 = vmatpush1.msra.mxu0 0.0
    %56 = vmatprep.subr.mxu0 0.0
    %57 = vmatpush1.msra.mxu0 0.0
    %58 = vmatprep.subr.mxu0 0.0
    %59 = vmatpush1.msra.mxu0 0.0
    %60 = vmatprep.subr.mxu0 0.0
    %61 = vmatpush1.msra.mxu0 0.0
    %62 = vmatprep.subr.mxu0 0.0
    %63 = vmatpush1.msra.mxu0 0.0
    %64 = vmatprep.subr.mxu0 0.0
    %65 = vmatpush1.msra.mxu0 0.0
    %66 = vmatprep.subr.mxu0 0.0
    %67 = vmatpush1.msra.mxu0 0.0
    %68 = vmatprep.subr.mxu0 0.0
    %69 = vmatpush1.msra.mxu0 0.0
    %70 = vmatprep.subr.mxu0 0.0
    %71 = vmatpush1.msra.mxu0 0.0
    %72 = vmatprep.subr.mxu0 0.0
    %73 = vmatpush1.msra.mxu0 0.0
    %74 = vmatprep.subr.mxu0 0.0
    %75 = vmatpush1.msra.mxu0 0.0
    %76 = vmatprep.subr.mxu0 0.0
    %77 = vmatpush1.msra.mxu0 0.0
    %78 = vmatprep.subr.mxu0 0.0
    %79 = vmatpush1.msra.mxu0 0.0
    %80 = vmatprep.subr.mxu0 0.0
    %81 = vmatpush1.msra.mxu0 0.0
    %82 = vmatprep.subr.mxu0 0.0
    %83 = vmatpush1.msra.mxu0 0.0
    %84 = vmatprep.subr.mxu0 0.0
    %85 = vmatpush1.msra.mxu0 0.0
    %86 = vmatprep.subr.mxu0 0.0
    %87 = vmatpush1.msra.mxu0 0.0
    %88 = vmatprep.subr.mxu0 0.0
    %89 = vmatpush1.msra.mxu0 0.0
    %90 = vmatprep.subr.mxu0 0.0
    %91 = vmatpush1.msra.mxu0 0.0
    %92 = vmatprep.subr.mxu0 0.0
    %93 = vmatpush1.msra.mxu0 0.0
    %94 = vmatprep.subr.mxu0 0.0
    %95 = vmatpush1.msra.mxu0 0.0
    %96 = vmatprep.subr.mxu0 0.0
    %97 = vmatpush1.msra.mxu0 0.0
    %98 = vmatprep.subr.mxu0 0.0
    %99 = vmatpush1.msra.mxu0 0.0
    %100 = vmatprep.mubr.f32.mxu0 0.0
    %v101 = vand.u32 %v33, 4294901760
    %v102 = vsub.f32 %v33, %v101
    %v103 = vand.u32 %v102, 4294901760
    %v104 = vsub.f32 %v102, %v103
    %v105 = vand.u32 %v104, 4294901760
    %106 = vmatmul.mubr.f32.gmra.mrb[0].mxu0 %v105
    %v107 = vpop.f32.mrb[0].mxu0
    %v108 = vadd.f32 0.0, %v107
    %v109 = vpop.f32.mrb[0].mxu0
    %110 = vdwg.mxu0
    %111 = vmatprep.subr.mxu0 0.0
    %v112 = vand.u32 %v30, 4294901760
    %v113 = vsub.f32 %v30, %v112
    %v114 = vand.u32 %v113, 4294901760
    %v115 = vsub.f32 %v113, %v114
    %v116 = vand.u32 %v115, 4294901760
    %117 = vmatpush1.msra.mxu0 %v116
    %118 = vmatprep.subr.mxu0 0.0
    %119 = vmatpush1.msra.mxu0 0.0
    %120 = vmatprep.subr.mxu0 0.0
    %121 = vmatpush1.msra.mxu0 0.0
    %122 = vmatprep.subr.mxu0 0.0
    %123 = vmatpush1.msra.mxu0 0.0
    %124 = vmatprep.subr.mxu0 0.0
    %125 = vmatpush1.msra.mxu0 0.0
    %126 = vmatprep.subr.mxu0 0.0
    %127 = vmatpush1.msra.mxu0 0.0
    %128 = vmatprep.subr.mxu0 0.0
    %129 = vmatpush1.msra.mxu0 0.0
    %130 = vmatprep.subr.mxu0 0.0
    %131 = vmatpush1.msra.mxu0 0.0
    %132 = vmatprep.subr.mxu0 0.0
    %133 = vmatpush1.msra.mxu0 0.0
    %134 = vmatprep.subr.mxu0 0.0
    %135 = vmatpush1.msra.mxu0 0.0
    %136 = vmatprep.subr.mxu0 0.0
    %137 = vmatpush1.msra.mxu0 0.0
    %138 = vmatprep.subr.mxu0 0.0
    %139 = vmatpush1.msra.mxu0 0.0
    %140 = vmatprep.subr.mxu0 0.0
    %141 = vmatpush1.msra.mxu0 0.0
    %142 = vmatprep.subr.mxu0 0.0
    %143 = vmatpush1.msra.mxu0 0.0
    %144 = vmatprep.subr.mxu0 0.0
    %145 = vmatpush1.msra.mxu0 0.0
    %146 = vmatprep.subr.mxu0 0.0
    %147 = vmatpush1.msra.mxu0 0.0
    %148 = vmatprep.subr.mxu0 0.0
    %149 = vmatpush1.msra.mxu0 0.0
    %150 = vmatprep.subr.mxu0 0.0
    %151 = vmatpush1.msra.mxu0 0.0
    %152 = vmatprep.subr.mxu0 0.0
    %153 = vmatpush1.msra.mxu0 0.0
    %154 = vmatprep.subr.mxu0 0.0
    %155 = vmatpush1.msra.mxu0 0.0
    %156 = vmatprep.subr.mxu0 0.0
    %157 = vmatpush1.msra.mxu0 0.0
    %158 = vmatprep.subr.mxu0 0.0
    %159 = vmatpush1.msra.mxu0 0.0
    %160 = vmatprep.subr.mxu0 0.0
    %161 = vmatpush1.msra.mxu0 0.0
    %162 = vmatprep.subr.mxu0 0.0
    %163 = vmatpush1.msra.mxu0 0.0
    %164 = vmatprep.subr.mxu0 0.0
    %165 = vmatpush1.msra.mxu0 0.0
    %166 = vmatprep.subr.mxu0 0.0
    %167 = vmatpush1.msra.mxu0 0.0
    %168 = vmatprep.subr.mxu0 0.0
    %169 = vmatpush1.msra.mxu0 0.0
    %170 = vmatprep.subr.mxu0 0.0
    %171 = vmatpush1.msra.mxu0 0.0
    %172 = vmatprep.subr.mxu0 0.0
    %173 = vmatpush1.msra.mxu0 0.0
    %174 = vmatprep.subr.mxu0 0.0
    %175 = vmatpush1.msra.mxu0 0.0
    %176 = vmatprep.subr.mxu0 0.0
    %177 = vmatpush1.msra.mxu0 0.0
    %178 = vmatprep.subr.mxu0 0.0
    %179 = vmatpush1.msra.mxu0 0.0
    %180 = vmatprep.mubr.f32.mxu0 0.0
    %v181 = vand.u32 %v33, 4294901760
    %182 = vmatmul.mubr.f32.gmra.mrb[0].mxu0 %v181
    %v183 = vpop.f32.mrb[0].mxu0
    %v184 = vadd.f32 %v108, %v183
    %v185 = vpop.f32.mrb[0].mxu0
    %186 = vdwg.mxu0
    %187 = vmatprep.subr.mxu0 0.0
    %v188 = vand.u32 %v30, 4294901760
    %v189 = vsub.f32 %v30, %v188
    %190 = vmatpush1.msra.mxu0 %v189
    %191 = vmatprep.subr.mxu0 0.0
    %192 = vmatpush1.msra.mxu0 0.0
    %193 = vmatprep.subr.mxu0 0.0
    %194 = vmatpush1.msra.mxu0 0.0
    %195 = vmatprep.subr.mxu0 0.0
    %196 = vmatpush1.msra.mxu0 0.0
    %197 = vmatprep.subr.mxu0 0.0
    %198 = vmatpush1.msra.mxu0 0.0
    %199 = vmatprep.subr.mxu0 0.0
    %200 = vmatpush1.msra.mxu0 0.0
    %201 = vmatprep.subr.mxu0 0.0
    %202 = vmatpush1.msra.mxu0 0.0
    %203 = vmatprep.subr.mxu0 0.0
    %204 = vmatpush1.msra.mxu0 0.0
    %205 = vmatprep.subr.mxu0 0.0
    %206 = vmatpush1.msra.mxu0 0.0
    %207 = vmatprep.subr.mxu0 0.0
    %208 = vmatpush1.msra.mxu0 0.0
    %209 = vmatprep.subr.mxu0 0.0
    %210 = vmatpush1.msra.mxu0 0.0
    %211 = vmatprep.subr.mxu0 0.0
    %212 = vmatpush1.msra.mxu0 0.0
    %213 = vmatprep.subr.mxu0 0.0
    %214 = vmatpush1.msra.mxu0 0.0
    %215 = vmatprep.subr.mxu0 0.0
    %216 = vmatpush1.msra.mxu0 0.0
    %217 = vmatprep.subr.mxu0 0.0
    %218 = vmatpush1.msra.mxu0 0.0
    %219 = vmatprep.subr.mxu0 0.0
    %220 = vmatpush1.msra.mxu0 0.0
    %221 = vmatprep.subr.mxu0 0.0
    %222 = vmatpush1.msra.mxu0 0.0
    %223 = vmatprep.subr.mxu0 0.0
    %224 = vmatpush1.msra.mxu0 0.0
    %225 = vmatprep.subr.mxu0 0.0
    %226 = vmatpush1.msra.mxu0 0.0
    %227 = vmatprep.subr.mxu0 0.0
    %228 = vmatpush1.msra.mxu0 0.0
    %229 = vmatprep.subr.mxu0 0.0
    %230 = vmatpush1.msra.mxu0 0.0
    %231 = vmatprep.subr.mxu0 0.0
    %232 = vmatpush1.msra.mxu0 0.0
    %233 = vmatprep.subr.mxu0 0.0
    %234 = vmatpush1.msra.mxu0 0.0
    %235 = vmatprep.subr.mxu0 0.0
    %236 = vmatpush1.msra.mxu0 0.0
    %237 = vmatprep.subr.mxu0 0.0
    %238 = vmatpush1.msra.mxu0 0.0
    %239 = vmatprep.subr.mxu0 0.0
    %240 = vmatpush1.msra.mxu0 0.0
    %241 = vmatprep.subr.mxu0 0.0
    %242 = vmatpush1.msra.mxu0 0.0
    %243 = vmatprep.subr.mxu0 0.0
    %244 = vmatpush1.msra.mxu0 0.0
    %245 = vmatprep.subr.mxu0 0.0
    %246 = vmatpush1.msra.mxu0 0.0
    %247 = vmatprep.subr.mxu0 0.0
    %248 = vmatpush1.msra.mxu0 0.0
    %249 = vmatprep.subr.mxu0 0.0
    %250 = vmatpush1.msra.mxu0 0.0
    %251 = vmatprep.subr.mxu0 0.0
    %252 = vmatpush1.msra.mxu0 0.0
    %253 = vmatprep.mubr.f32.mxu0 0.0
    %v254 = vand.u32 %v33, 4294901760
    %v255 = vsub.f32 %v33, %v254
    %256 = vmatmul.mubr.f32.gmra.mrb[0].mxu0 %v255
    %v257 = vpop.f32.mrb[0].mxu0
    %v258 = vadd.f32 %v184, %v257
    %v259 = vpop.f32.mrb[0].mxu0
    %260 = vdwg.mxu0
    %261 = vmatprep.subr.mxu0 0.0
    %v262 = vand.u32 %v30, 4294901760
    %263 = vmatpush1.msra.mxu0 %v262
    %264 = vmatprep.subr.mxu0 0.0
    %265 = vmatpush1.msra.mxu0 0.0
    %266 = vmatprep.subr.mxu0 0.0
    %267 = vmatpush1.msra.mxu0 0.0
    %268 = vmatprep.subr.mxu0 0.0
    %269 = vmatpush1.msra.mxu0 0.0
    %270 = vmatprep.subr.mxu0 0.0
    %271 = vmatpush1.msra.mxu0 0.0
    %272 = vmatprep.subr.mxu0 0.0
    %273 = vmatpush1.msra.mxu0 0.0
    %274 = vmatprep.subr.mxu0 0.0
    %275 = vmatpush1.msra.mxu0 0.0
    %276 = vmatprep.subr.mxu0 0.0
    %277 = vmatpush1.msra.mxu0 0.0
    %278 = vmatprep.subr.mxu0 0.0
    %279 = vmatpush1.msra.mxu0 0.0
    %280 = vmatprep.subr.mxu0 0.0
    %281 = vmatpush1.msra.mxu0 0.0
    %282 = vmatprep.subr.mxu0 0.0
    %283 = vmatpush1.msra.mxu0 0.0
    %284 = vmatprep.subr.mxu0 0.0
    %285 = vmatpush1.msra.mxu0 0.0
    %286 = vmatprep.subr.mxu0 0.0
    %287 = vmatpush1.msra.mxu0 0.0
    %288 = vmatprep.subr.mxu0 0.0
    %289 = vmatpush1.msra.mxu0 0.0
    %290 = vmatprep.subr.mxu0 0.0
    %291 = vmatpush1.msra.mxu0 0.0
    %292 = vmatprep.subr.mxu0 0.0
    %293 = vmatpush1.msra.mxu0 0.0
    %294 = vmatprep.subr.mxu0 0.0
    %295 = vmatpush1.msra.mxu0 0.0
    %296 = vmatprep.subr.mxu0 0.0
    %297 = vmatpush1.msra.mxu0 0.0
    %298 = vmatprep.subr.mxu0 0.0
    %299 = vmatpush1.msra.mxu0 0.0
    %300 = vmatprep.subr.mxu0 0.0
    %301 = vmatpush1.msra.mxu0 0.0
    %302 = vmatprep.subr.mxu0 0.0
    %303 = vmatpush1.msra.mxu0 0.0
    %304 = vmatprep.subr.mxu0 0.0
    %305 = vmatpush1.msra.mxu0 0.0
    %306 = vmatprep.subr.mxu0 0.0
    %307 = vmatpush1.msra.mxu0 0.0
    %308 = vmatprep.subr.mxu0 0.0
    %309 = vmatpush1.msra.mxu0 0.0
    %310 = vmatprep.subr.mxu0 0.0
    %311 = vmatpush1.msra.mxu0 0.0
    %312 = vmatprep.subr.mxu0 0.0
    %313 = vmatpush1.msra.mxu0 0.0
    %314 = vmatprep.subr.mxu0 0.0
    %315 = vmatpush1.msra.mxu0 0.0
    %316 = vmatprep.subr.mxu0 0.0
    %317 = vmatpush1.msra.mxu0 0.0
    %318 = vmatprep.subr.mxu0 0.0
    %319 = vmatpush1.msra.mxu0 0.0
    %320 = vmatprep.subr.mxu0 0.0
    %321 = vmatpush1.msra.mxu0 0.0
    %322 = vmatprep.subr.mxu0 0.0
    %323 = vmatpush1.msra.mxu0 0.0
    %324 = vmatprep.subr.mxu0 0.0
    %325 = vmatpush1.msra.mxu0 0.0
    %326 = vmatprep.mubr.f32.mxu0 0.0
    %v327 = vand.u32 %v33, 4294901760
    %v328 = vsub.f32 %v33, %v327
    %v329 = vand.u32 %v328, 4294901760
    %330 = vmatmul.mubr.f32.gmra.mrb[0].mxu0 %v329
    %v331 = vpop.f32.mrb[0].mxu0
    %v332 = vadd.f32 %v258, %v331
    %v333 = vpop.f32.mrb[0].mxu0
    %334 = vdwg.mxu0
    %335 = vmatprep.subr.mxu0 0.0
    %v336 = vand.u32 %v30, 4294901760
    %v337 = vsub.f32 %v30, %v336
    %v338 = vand.u32 %v337, 4294901760
    %339 = vmatpush1.msra.mxu0 %v338
    %340 = vmatprep.subr.mxu0 0.0
    %341 = vmatpush1.msra.mxu0 0.0
    %342 = vmatprep.subr.mxu0 0.0
    %343 = vmatpush1.msra.mxu0 0.0
    %344 = vmatprep.subr.mxu0 0.0
    %345 = vmatpush1.msra.mxu0 0.0
    %346 = vmatprep.subr.mxu0 0.0
    %347 = vmatpush1.msra.mxu0 0.0
    %348 = vmatprep.subr.mxu0 0.0
    %349 = vmatpush1.msra.mxu0 0.0
    %350 = vmatprep.subr.mxu0 0.0
    %351 = vmatpush1.msra.mxu0 0.0
    %352 = vmatprep.subr.mxu0 0.0
    %353 = vmatpush1.msra.mxu0 0.0
    %354 = vmatprep.subr.mxu0 0.0
    %355 = vmatpush1.msra.mxu0 0.0
    %356 = vmatprep.subr.mxu0 0.0
    %357 = vmatpush1.msra.mxu0 0.0
    %358 = vmatprep.subr.mxu0 0.0
    %359 = vmatpush1.msra.mxu0 0.0
    %360 = vmatprep.subr.mxu0 0.0
    %361 = vmatpush1.msra.mxu0 0.0
    %362 = vmatprep.subr.mxu0 0.0
    %363 = vmatpush1.msra.mxu0 0.0
    %364 = vmatprep.subr.mxu0 0.0
    %365 = vmatpush1.msra.mxu0 0.0
    %366 = vmatprep.subr.mxu0 0.0
    %367 = vmatpush1.msra.mxu0 0.0
    %368 = vmatprep.subr.mxu0 0.0
    %369 = vmatpush1.msra.mxu0 0.0
    %370 = vmatprep.subr.mxu0 0.0
    %371 = vmatpush1.msra.mxu0 0.0
    %372 = vmatprep.subr.mxu0 0.0
    %373 = vmatpush1.msra.mxu0 0.0
    %374 = vmatprep.subr.mxu0 0.0
    %375 = vmatpush1.msra.mxu0 0.0
    %376 = vmatprep.subr.mxu0 0.0
    %377 = vmatpush1.msra.mxu0 0.0
    %378 = vmatprep.subr.mxu0 0.0
    %379 = vmatpush1.msra.mxu0 0.0
    %380 = vmatprep.subr.mxu0 0.0
    %381 = vmatpush1.msra.mxu0 0.0
    %382 = vmatprep.subr.mxu0 0.0
    %383 = vmatpush1.msra.mxu0 0.0
    %384 = vmatprep.subr.mxu0 0.0
    %385 = vmatpush1.msra.mxu0 0.0
    %386 = vmatprep.subr.mxu0 0.0
    %387 = vmatpush1.msra.mxu0 0.0
    %388 = vmatprep.subr.mxu0 0.0
    %389 = vmatpush1.msra.mxu0 0.0
    %390 = vmatprep.subr.mxu0 0.0
    %391 = vmatpush1.msra.mxu0 0.0
    %392 = vmatprep.subr.mxu0 0.0
    %393 = vmatpush1.msra.mxu0 0.0
    %394 = vmatprep.subr.mxu0 0.0
    %395 = vmatpush1.msra.mxu0 0.0
    %396 = vmatprep.subr.mxu0 0.0
    %397 = vmatpush1.msra.mxu0 0.0
    %398 = vmatprep.subr.mxu0 0.0
    %399 = vmatpush1.msra.mxu0 0.0
    %400 = vmatprep.subr.mxu0 0.0
    %401 = vmatpush1.msra.mxu0 0.0
    %402 = vmatprep.mubr.f32.mxu0 0.0
    %v403 = vand.u32 %v33, 4294901760
    %404 = vmatmul.mubr.f32.gmra.mrb[0].mxu0 %v403
    %v405 = vpop.f32.mrb[0].mxu0
    %v406 = vadd.f32 %v332, %v405
    %v407 = vpop.f32.mrb[0].mxu0
    %408 = vdwg.mxu0
    %409 = vmatprep.subr.mxu0 0.0
    %v410 = vand.u32 %v30, 4294901760
    %411 = vmatpush1.msra.mxu0 %v410
    %412 = vmatprep.subr.mxu0 0.0
    %413 = vmatpush1.msra.mxu0 0.0
    %414 = vmatprep.subr.mxu0 0.0
    %415 = vmatpush1.msra.mxu0 0.0
    %416 = vmatprep.subr.mxu0 0.0
    %417 = vmatpush1.msra.mxu0 0.0
    %418 = vmatprep.subr.mxu0 0.0
    %419 = vmatpush1.msra.mxu0 0.0
    %420 = vmatprep.subr.mxu0 0.0
    %421 = vmatpush1.msra.mxu0 0.0
    %422 = vmatprep.subr.mxu0 0.0
    %423 = vmatpush1.msra.mxu0 0.0
    %424 = vmatprep.subr.mxu0 0.0
    %425 = vmatpush1.msra.mxu0 0.0
    %426 = vmatprep.subr.mxu0 0.0
    %427 = vmatpush1.msra.mxu0 0.0
    %428 = vmatprep.subr.mxu0 0.0
    %429 = vmatpush1.msra.mxu0 0.0
    %430 = vmatprep.subr.mxu0 0.0
    %431 = vmatpush1.msra.mxu0 0.0
    %432 = vmatprep.subr.mxu0 0.0
    %433 = vmatpush1.msra.mxu0 0.0
    %434 = vmatprep.subr.mxu0 0.0
    %435 = vmatpush1.msra.mxu0 0.0
    %436 = vmatprep.subr.mxu0 0.0
    %437 = vmatpush1.msra.mxu0 0.0
    %438 = vmatprep.subr.mxu0 0.0
    %439 = vmatpush1.msra.mxu0 0.0
    %440 = vmatprep.subr.mxu0 0.0
    %441 = vmatpush1.msra.mxu0 0.0
    %442 = vmatprep.subr.mxu0 0.0
    %443 = vmatpush1.msra.mxu0 0.0
    %444 = vmatprep.subr.mxu0 0.0
    %445 = vmatpush1.msra.mxu0 0.0
    %446 = vmatprep.subr.mxu0 0.0
    %447 = vmatpush1.msra.mxu0 0.0
    %448 = vmatprep.subr.mxu0 0.0
    %449 = vmatpush1.msra.mxu0 0.0
    %450 = vmatprep.subr.mxu0 0.0
    %451 = vmatpush1.msra.mxu0 0.0
    %452 = vmatprep.subr.mxu0 0.0
    %453 = vmatpush1.msra.mxu0 0.0
    %454 = vmatprep.subr.mxu0 0.0
    %455 = vmatpush1.msra.mxu0 0.0
    %456 = vmatprep.subr.mxu0 0.0
    %457 = vmatpush1.msra.mxu0 0.0
    %458 = vmatprep.subr.mxu0 0.0
    %459 = vmatpush1.msra.mxu0 0.0
    %460 = vmatprep.subr.mxu0 0.0
    %461 = vmatpush1.msra.mxu0 0.0
    %462 = vmatprep.subr.mxu0 0.0
    %463 = vmatpush1.msra.mxu0 0.0
    %464 = vmatprep.subr.mxu0 0.0
    %465 = vmatpush1.msra.mxu0 0.0
    %466 = vmatprep.subr.mxu0 0.0
    %467 = vmatpush1.msra.mxu0 0.0
    %468 = vmatprep.subr.mxu0 0.0
    %469 = vmatpush1.msra.mxu0 0.0
    %470 = vmatprep.subr.mxu0 0.0
    %471 = vmatpush1.msra.mxu0 0.0
    %472 = vmatprep.subr.mxu0 0.0
    %473 = vmatpush1.msra.mxu0 0.0
    %474 = vmatprep.mubr.f32.mxu0 0.0
    %v475 = vand.u32 %v33, 4294901760
    %476 = vmatmul.mubr.f32.gmra.mrb[0].mxu0 %v475
    %v477 = vpop.f32.mrb[0].mxu0
    %v478 = vadd.f32 %v406, %v477
    %v479 = vpop.f32.mrb[0].mxu0
    %480 = vdwg.mxu0
    %481 = vst [vmem:[%s2 + $0x8] sm:$0xff] %v478
    %s482 = scalar_lea.vmem [#allocation2], 8
    %v483 = vld [vmem:[%s482] sm:$0xff]
    %484 = vmatprep.subr.mxu0 0.0
    %v485 = vand.u32 %v483, 4294901760
    %486 = vmatpush1.msra.mxu0 %v485
    %487 = vmatprep.subr.mxu0 0.0
    %488 = vmatpush1.msra.mxu0 0.0
    %489 = vmatprep.subr.mxu0 0.0
    %490 = vmatpush1.msra.mxu0 0.0
    %491 = vmatprep.subr.mxu0 0.0
    %492 = vmatpush1.msra.mxu0 0.0
    %493 = vmatprep.subr.mxu0 0.0
    %494 = vmatpush1.msra.mxu0 0.0
    %495 = vmatprep.subr.mxu0 0.0
    %496 = vmatpush1.msra.mxu0 0.0
    %497 = vmatprep.subr.mxu0 0.0
    %498 = vmatpush1.msra.mxu0 0.0
    %499 = vmatprep.subr.mxu0 0.0
    %500 = vmatpush1.msra.mxu0 0.0
    %501 = vmatprep.subr.mxu0 0.0
    %502 = vmatpush1.msra.mxu0 0.0
    %503 = vmatprep.subr.mxu0 0.0
    %504 = vmatpush1.msra.mxu0 0.0
    %505 = vmatprep.subr.mxu0 0.0
    %506 = vmatpush1.msra.mxu0 0.0
    %507 = vmatprep.subr.mxu0 0.0
    %508 = vmatpush1.msra.mxu0 0.0
    %509 = vmatprep.subr.mxu0 0.0
    %510 = vmatpush1.msra.mxu0 0.0
    %511 = vmatprep.subr.mxu0 0.0
    %512 = vmatpush1.msra.mxu0 0.0
    %513 = vmatprep.subr.mxu0 0.0
    %514 = vmatpush1.msra.mxu0 0.0
    %515 = vmatprep.subr.mxu0 0.0
    %516 = vmatpush1.msra.mxu0 0.0
    %517 = vmatprep.subr.mxu0 0.0
    %518 = vmatpush1.msra.mxu0 0.0
    %519 = vmatprep.subr.mxu0 0.0
    %520 = vmatpush1.msra.mxu0 0.0
    %521 = vmatprep.subr.mxu0 0.0
    %522 = vmatpush1.msra.mxu0 0.0
    %523 = vmatprep.subr.mxu0 0.0
    %524 = vmatpush1.msra.mxu0 0.0
    %525 = vmatprep.subr.mxu0 0.0
    %526 = vmatpush1.msra.mxu0 0.0
    %527 = vmatprep.subr.mxu0 0.0
    %528 = vmatpush1.msra.mxu0 0.0
    %529 = vmatprep.subr.mxu0 0.0
    %530 = vmatpush1.msra.mxu0 0.0
    %531 = vmatprep.subr.mxu0 0.0
    %532 = vmatpush1.msra.mxu0 0.0
    %533 = vmatprep.subr.mxu0 0.0
    %534 = vmatpush1.msra.mxu0 0.0
    %535 = vmatprep.subr.mxu0 0.0
    %536 = vmatpush1.msra.mxu0 0.0
    %537 = vmatprep.subr.mxu0 0.0
    %538 = vmatpush1.msra.mxu0 0.0
    %539 = vmatprep.subr.mxu0 0.0
    %540 = vmatpush1.msra.mxu0 0.0
    %541 = vmatprep.subr.mxu0 0.0
    %542 = vmatpush1.msra.mxu0 0.0
    %543 = vmatprep.subr.mxu0 0.0
    %544 = vmatpush1.msra.mxu0 0.0
    %545 = vmatprep.subr.mxu0 0.0
    %546 = vmatpush1.msra.mxu0 0.0
    %547 = vmatprep.subr.mxu0 0.0
    %548 = vmatpush1.msra.mxu0 0.0
    %549 = vmatprep.mubr.f32.mxu0 0.0
    %v550 = vand.u32 %v33, 4294901760
    %v551 = vsub.f32 %v33, %v550
    %v552 = vand.u32 %v551, 4294901760
    %v553 = vsub.f32 %v551, %v552
    %v554 = vand.u32 %v553, 4294901760
    %555 = vmatmul.mubr.f32.gmra.mrb[0].mxu0 %v554
    %v556 = vpop.f32.mrb[0].mxu0
    %v557 = vadd.f32 0.0, %v556
    %v558 = vpop.f32.mrb[0].mxu0
    %559 = vdwg.mxu0
    %560 = vmatprep.subr.mxu0 0.0
    %v561 = vand.u32 %v483, 4294901760
    %v562 = vsub.f32 %v483, %v561
    %v563 = vand.u32 %v562, 4294901760
    %v564 = vsub.f32 %v562, %v563
    %v565 = vand.u32 %v564, 4294901760
    %566 = vmatpush1.msra.mxu0 %v565
    %567 = vmatprep.subr.mxu0 0.0
    %568 = vmatpush1.msra.mxu0 0.0
    %569 = vmatprep.subr.mxu0 0.0
    %570 = vmatpush1.msra.mxu0 0.0
    %571 = vmatprep.subr.mxu0 0.0
    %572 = vmatpush1.msra.mxu0 0.0
    %573 = vmatprep.subr.mxu0 0.0
    %574 = vmatpush1.msra.mxu0 0.0
    %575 = vmatprep.subr.mxu0 0.0
    %576 = vmatpush1.msra.mxu0 0.0
    %577 = vmatprep.subr.mxu0 0.0
    %578 = vmatpush1.msra.mxu0 0.0
    %579 = vmatprep.subr.mxu0 0.0
    %580 = vmatpush1.msra.mxu0 0.0
    %581 = vmatprep.subr.mxu0 0.0
    %582 = vmatpush1.msra.mxu0 0.0
    %583 = vmatprep.subr.mxu0 0.0
    %584 = vmatpush1.msra.mxu0 0.0
    %585 = vmatprep.subr.mxu0 0.0
    %586 = vmatpush1.msra.mxu0 0.0
    %587 = vmatprep.subr.mxu0 0.0
    %588 = vmatpush1.msra.mxu0 0.0
    %589 = vmatprep.subr.mxu0 0.0
    %590 = vmatpush1.msra.mxu0 0.0
    %591 = vmatprep.subr.mxu0 0.0
    %592 = vmatpush1.msra.mxu0 0.0
    %593 = vmatprep.subr.mxu0 0.0
    %594 = vmatpush1.msra.mxu0 0.0
    %595 = vmatprep.subr.mxu0 0.0
    %596 = vmatpush1.msra.mxu0 0.0
    %597 = vmatprep.subr.mxu0 0.0
    %598 = vmatpush1.msra.mxu0 0.0
    %599 = vmatprep.subr.mxu0 0.0
    %600 = vmatpush1.msra.mxu0 0.0
    %601 = vmatprep.subr.mxu0 0.0
    %602 = vmatpush1.msra.mxu0 0.0
    %603 = vmatprep.subr.mxu0 0.0
    %604 = vmatpush1.msra.mxu0 0.0
    %605 = vmatprep.subr.mxu0 0.0
    %606 = vmatpush1.msra.mxu0 0.0
    %607 = vmatprep.subr.mxu0 0.0
    %608 = vmatpush1.msra.mxu0 0.0
    %609 = vmatprep.subr.mxu0 0.0
    %610 = vmatpush1.msra.mxu0 0.0
    %611 = vmatprep.subr.mxu0 0.0
    %612 = vmatpush1.msra.mxu0 0.0
    %613 = vmatprep.subr.mxu0 0.0
    %614 = vmatpush1.msra.mxu0 0.0
    %615 = vmatprep.subr.mxu0 0.0
    %616 = vmatpush1.msra.mxu0 0.0
    %617 = vmatprep.subr.mxu0 0.0
    %618 = vmatpush1.msra.mxu0 0.0
    %619 = vmatprep.subr.mxu0 0.0
    %620 = vmatpush1.msra.mxu0 0.0
    %621 = vmatprep.subr.mxu0 0.0
    %622 = vmatpush1.msra.mxu0 0.0
    %623 = vmatprep.subr.mxu0 0.0
    %624 = vmatpush1.msra.mxu0 0.0
    %625 = vmatprep.subr.mxu0 0.0
    %626 = vmatpush1.msra.mxu0 0.0
    %627 = vmatprep.subr.mxu0 0.0
    %628 = vmatpush1.msra.mxu0 0.0
    %629 = vmatprep.mubr.f32.mxu0 0.0
    %v630 = vand.u32 %v33, 4294901760
    %631 = vmatmul.mubr.f32.gmra.mrb[0].mxu0 %v630
    %v632 = vpop.f32.mrb[0].mxu0
    %v633 = vadd.f32 %v557, %v632
    %v634 = vpop.f32.mrb[0].mxu0
    %635 = vdwg.mxu0
    %636 = vmatprep.subr.mxu0 0.0
    %v637 = vand.u32 %v483, 4294901760
    %v638 = vsub.f32 %v483, %v637
    %639 = vmatpush1.msra.mxu0 %v638
    %640 = vmatprep.subr.mxu0 0.0
    %641 = vmatpush1.msra.mxu0 0.0
    %642 = vmatprep.subr.mxu0 0.0
    %643 = vmatpush1.msra.mxu0 0.0
    %644 = vmatprep.subr.mxu0 0.0
    %645 = vmatpush1.msra.mxu0 0.0
    %646 = vmatprep.subr.mxu0 0.0
    %647 = vmatpush1.msra.mxu0 0.0
    %648 = vmatprep.subr.mxu0 0.0
    %649 = vmatpush1.msra.mxu0 0.0
    %650 = vmatprep.subr.mxu0 0.0
    %651 = vmatpush1.msra.mxu0 0.0
    %652 = vmatprep.subr.mxu0 0.0
    %653 = vmatpush1.msra.mxu0 0.0
    %654 = vmatprep.subr.mxu0 0.0
    %655 = vmatpush1.msra.mxu0 0.0
    %656 = vmatprep.subr.mxu0 0.0
    %657 = vmatpush1.msra.mxu0 0.0
    %658 = vmatprep.subr.mxu0 0.0
    %659 = vmatpush1.msra.mxu0 0.0
    %660 = vmatprep.subr.mxu0 0.0
    %661 = vmatpush1.msra.mxu0 0.0
    %662 = vmatprep.subr.mxu0 0.0
    %663 = vmatpush1.msra.mxu0 0.0
    %664 = vmatprep.subr.mxu0 0.0
    %665 = vmatpush1.msra.mxu0 0.0
    %666 = vmatprep.subr.mxu0 0.0
    %667 = vmatpush1.msra.mxu0 0.0
    %668 = vmatprep.subr.mxu0 0.0
    %669 = vmatpush1.msra.mxu0 0.0
    %670 = vmatprep.subr.mxu0 0.0
    %671 = vmatpush1.msra.mxu0 0.0
    %672 = vmatprep.subr.mxu0 0.0
    %673 = vmatpush1.msra.mxu0 0.0
    %674 = vmatprep.subr.mxu0 0.0
    %675 = vmatpush1.msra.mxu0 0.0
    %676 = vmatprep.subr.mxu0 0.0
    %677 = vmatpush1.msra.mxu0 0.0
    %678 = vmatprep.subr.mxu0 0.0
    %679 = vmatpush1.msra.mxu0 0.0
    %680 = vmatprep.subr.mxu0 0.0
    %681 = vmatpush1.msra.mxu0 0.0
    %682 = vmatprep.subr.mxu0 0.0
    %683 = vmatpush1.msra.mxu0 0.0
    %684 = vmatprep.subr.mxu0 0.0
    %685 = vmatpush1.msra.mxu0 0.0
    %686 = vmatprep.subr.mxu0 0.0
    %687 = vmatpush1.msra.mxu0 0.0
    %688 = vmatprep.subr.mxu0 0.0
    %689 = vmatpush1.msra.mxu0 0.0
    %690 = vmatprep.subr.mxu0 0.0
    %691 = vmatpush1.msra.mxu0 0.0
    %692 = vmatprep.subr.mxu0 0.0
    %693 = vmatpush1.msra.mxu0 0.0
    %694 = vmatprep.subr.mxu0 0.0
    %695 = vmatpush1.msra.mxu0 0.0
    %696 = vmatprep.subr.mxu0 0.0
    %697 = vmatpush1.msra.mxu0 0.0
    %698 = vmatprep.subr.mxu0 0.0
    %699 = vmatpush1.msra.mxu0 0.0
    %700 = vmatprep.subr.mxu0 0.0
    %701 = vmatpush1.msra.mxu0 0.0
    %702 = vmatprep.mubr.f32.mxu0 0.0
    %v703 = vand.u32 %v33, 4294901760
    %v704 = vsub.f32 %v33, %v703
    %705 = vmatmul.mubr.f32.gmra.mrb[0].mxu0 %v704
    %v706 = vpop.f32.mrb[0].mxu0
    %v707 = vadd.f32 %v633, %v706
    %v708 = vpop.f32.mrb[0].mxu0
    %709 = vdwg.mxu0
    %710 = vmatprep.subr.mxu0 0.0
    %v711 = vand.u32 %v483, 4294901760
    %712 = vmatpush1.msra.mxu0 %v711
    %713 = vmatprep.subr.mxu0 0.0
    %714 = vmatpush1.msra.mxu0 0.0
    %715 = vmatprep.subr.mxu0 0.0
    %716 = vmatpush1.msra.mxu0 0.0
    %717 = vmatprep.subr.mxu0 0.0
    %718 = vmatpush1.msra.mxu0 0.0
    %719 = vmatprep.subr.mxu0 0.0
    %720 = vmatpush1.msra.mxu0 0.0
    %721 = vmatprep.subr.mxu0 0.0
    %722 = vmatpush1.msra.mxu0 0.0
    %723 = vmatprep.subr.mxu0 0.0
    %724 = vmatpush1.msra.mxu0 0.0
    %725 = vmatprep.subr.mxu0 0.0
    %726 = vmatpush1.msra.mxu0 0.0
    %727 = vmatprep.subr.mxu0 0.0
    %728 = vmatpush1.msra.mxu0 0.0
    %729 = vmatprep.subr.mxu0 0.0
    %730 = vmatpush1.msra.mxu0 0.0
    %731 = vmatprep.subr.mxu0 0.0
    %732 = vmatpush1.msra.mxu0 0.0
    %733 = vmatprep.subr.mxu0 0.0
    %734 = vmatpush1.msra.mxu0 0.0
    %735 = vmatprep.subr.mxu0 0.0
    %736 = vmatpush1.msra.mxu0 0.0
    %737 = vmatprep.subr.mxu0 0.0
    %738 = vmatpush1.msra.mxu0 0.0
    %739 = vmatprep.subr.mxu0 0.0
    %740 = vmatpush1.msra.mxu0 0.0
    %741 = vmatprep.subr.mxu0 0.0
    %742 = vmatpush1.msra.mxu0 0.0
    %743 = vmatprep.subr.mxu0 0.0
    %744 = vmatpush1.msra.mxu0 0.0
    %745 = vmatprep.subr.mxu0 0.0
    %746 = vmatpush1.msra.mxu0 0.0
    %747 = vmatprep.subr.mxu0 0.0
    %748 = vmatpush1.msra.mxu0 0.0
    %749 = vmatprep.subr.mxu0 0.0
    %750 = vmatpush1.msra.mxu0 0.0
    %751 = vmatprep.subr.mxu0 0.0
    %752 = vmatpush1.msra.mxu0 0.0
    %753 = vmatprep.subr.mxu0 0.0
    %754 = vmatpush1.msra.mxu0 0.0
    %755 = vmatprep.subr.mxu0 0.0
    %756 = vmatpush1.msra.mxu0 0.0
    %757 = vmatprep.subr.mxu0 0.0
    %758 = vmatpush1.msra.mxu0 0.0
    %759 = vmatprep.subr.mxu0 0.0
    %760 = vmatpush1.msra.mxu0 0.0
    %761 = vmatprep.subr.mxu0 0.0
    %762 = vmatpush1.msra.mxu0 0.0
    %763 = vmatprep.subr.mxu0 0.0
    %764 = vmatpush1.msra.mxu0 0.0
    %765 = vmatprep.subr.mxu0 0.0
    %766 = vmatpush1.msra.mxu0 0.0
    %767 = vmatprep.subr.mxu0 0.0
    %768 = vmatpush1.msra.mxu0 0.0
    %769 = vmatprep.subr.mxu0 0.0
    %770 = vmatpush1.msra.mxu0 0.0
    %771 = vmatprep.subr.mxu0 0.0
    %772 = vmatpush1.msra.mxu0 0.0
    %773 = vmatprep.subr.mxu0 0.0
    %774 = vmatpush1.msra.mxu0 0.0
    %775 = vmatprep.mubr.f32.mxu0 0.0
    %v776 = vand.u32 %v33, 4294901760
    %v777 = vsub.f32 %v33, %v776
    %v778 = vand.u32 %v777, 4294901760
    %779 = vmatmul.mubr.f32.gmra.mrb[0].mxu0 %v778
    %v780 = vpop.f32.mrb[0].mxu0
    %v781 = vadd.f32 %v707, %v780
    %v782 = vpop.f32.mrb[0].mxu0
    %783 = vdwg.mxu0
    %784 = vmatprep.subr.mxu0 0.0
    %v785 = vand.u32 %v483, 4294901760
    %v786 = vsub.f32 %v483, %v785
    %v787 = vand.u32 %v786, 4294901760
    %788 = vmatpush1.msra.mxu0 %v787
    %789 = vmatprep.subr.mxu0 0.0
    %790 = vmatpush1.msra.mxu0 0.0
    %791 = vmatprep.subr.mxu0 0.0
    %792 = vmatpush1.msra.mxu0 0.0
    %793 = vmatprep.subr.mxu0 0.0
    %794 = vmatpush1.msra.mxu0 0.0
    %795 = vmatprep.subr.mxu0 0.0
    %796 = vmatpush1.msra.mxu0 0.0
    %797 = vmatprep.subr.mxu0 0.0
    %798 = vmatpush1.msra.mxu0 0.0
    %799 = vmatprep.subr.mxu0 0.0
    %800 = vmatpush1.msra.mxu0 0.0
    %801 = vmatprep.subr.mxu0 0.0
    %802 = vmatpush1.msra.mxu0 0.0
    %803 = vmatprep.subr.mxu0 0.0
    %804 = vmatpush1.msra.mxu0 0.0
    %805 = vmatprep.subr.mxu0 0.0
    %806 = vmatpush1.msra.mxu0 0.0
    %807 = vmatprep.subr.mxu0 0.0
    %808 = vmatpush1.msra.mxu0 0.0
    %809 = vmatprep.subr.mxu0 0.0
    %810 = vmatpush1.msra.mxu0 0.0
    %811 = vmatprep.subr.mxu0 0.0
    %812 = vmatpush1.msra.mxu0 0.0
    %813 = vmatprep.subr.mxu0 0.0
    %814 = vmatpush1.msra.mxu0 0.0
    %815 = vmatprep.subr.mxu0 0.0
    %816 = vmatpush1.msra.mxu0 0.0
    %817 = vmatprep.subr.mxu0 0.0
    %818 = vmatpush1.msra.mxu0 0.0
    %819 = vmatprep.subr.mxu0 0.0
    %820 = vmatpush1.msra.mxu0 0.0
    %821 = vmatprep.subr.mxu0 0.0
    %822 = vmatpush1.msra.mxu0 0.0
    %823 = vmatprep.subr.mxu0 0.0
    %824 = vmatpush1.msra.mxu0 0.0
    %825 = vmatprep.subr.mxu0 0.0
    %826 = vmatpush1.msra.mxu0 0.0
    %827 = vmatprep.subr.mxu0 0.0
    %828 = vmatpush1.msra.mxu0 0.0
    %829 = vmatprep.subr.mxu0 0.0
    %830 = vmatpush1.msra.mxu0 0.0
    %831 = vmatprep.subr.mxu0 0.0
    %832 = vmatpush1.msra.mxu0 0.0
    %833 = vmatprep.subr.mxu0 0.0
    %834 = vmatpush1.msra.mxu0 0.0
    %835 = vmatprep.subr.mxu0 0.0
    %836 = vmatpush1.msra.mxu0 0.0
    %837 = vmatprep.subr.mxu0 0.0
    %838 = vmatpush1.msra.mxu0 0.0
    %839 = vmatprep.subr.mxu0 0.0
    %840 = vmatpush1.msra.mxu0 0.0
    %841 = vmatprep.subr.mxu0 0.0
    %842 = vmatpush1.msra.mxu0 0.0
    %843 = vmatprep.subr.mxu0 0.0
    %844 = vmatpush1.msra.mxu0 0.0
    %845 = vmatprep.subr.mxu0 0.0
    %846 = vmatpush1.msra.mxu0 0.0
    %847 = vmatprep.subr.mxu0 0.0
    %848 = vmatpush1.msra.mxu0 0.0
    %849 = vmatprep.subr.mxu0 0.0
    %850 = vmatpush1.msra.mxu0 0.0
    %851 = vmatprep.mubr.f32.mxu0 0.0
    %v852 = vand.u32 %v33, 4294901760
    %853 = vmatmul.mubr.f32.gmra.mrb[0].mxu0 %v852
    %v854 = vpop.f32.mrb[0].mxu0
    %v855 = vadd.f32 %v781, %v854
    %v856 = vpop.f32.mrb[0].mxu0
    %857 = vdwg.mxu0
    %858 = vmatprep.subr.mxu0 0.0
    %v859 = vand.u32 %v483, 4294901760
    %860 = vmatpush1.msra.mxu0 %v859
    %861 = vmatprep.subr.mxu0 0.0
    %862 = vmatpush1.msra.mxu0 0.0
    %863 = vmatprep.subr.mxu0 0.0
    %864 = vmatpush1.msra.mxu0 0.0
    %865 = vmatprep.subr.mxu0 0.0
    %866 = vmatpush1.msra.mxu0 0.0
    %867 = vmatprep.subr.mxu0 0.0
    %868 = vmatpush1.msra.mxu0 0.0
    %869 = vmatprep.subr.mxu0 0.0
    %870 = vmatpush1.msra.mxu0 0.0
    %871 = vmatprep.subr.mxu0 0.0
    %872 = vmatpush1.msra.mxu0 0.0
    %873 = vmatprep.subr.mxu0 0.0
    %874 = vmatpush1.msra.mxu0 0.0
    %875 = vmatprep.subr.mxu0 0.0
    %876 = vmatpush1.msra.mxu0 0.0
    %877 = vmatprep.subr.mxu0 0.0
    %878 = vmatpush1.msra.mxu0 0.0
    %879 = vmatprep.subr.mxu0 0.0
    %880 = vmatpush1.msra.mxu0 0.0
    %881 = vmatprep.subr.mxu0 0.0
    %882 = vmatpush1.msra.mxu0 0.0
    %883 = vmatprep.subr.mxu0 0.0
    %884 = vmatpush1.msra.mxu0 0.0
    %885 = vmatprep.subr.mxu0 0.0
    %886 = vmatpush1.msra.mxu0 0.0
    %887 = vmatprep.subr.mxu0 0.0
    %888 = vmatpush1.msra.mxu0 0.0
    %889 = vmatprep.subr.mxu0 0.0
    %890 = vmatpush1.msra.mxu0 0.0
    %891 = vmatprep.subr.mxu0 0.0
    %892 = vmatpush1.msra.mxu0 0.0
    %893 = vmatprep.subr.mxu0 0.0
    %894 = vmatpush1.msra.mxu0 0.0
    %895 = vmatprep.subr.mxu0 0.0
    %896 = vmatpush1.msra.mxu0 0.0
    %897 = vmatprep.subr.mxu0 0.0
    %898 = vmatpush1.msra.mxu0 0.0
    %899 = vmatprep.subr.mxu0 0.0
    %900 = vmatpush1.msra.mxu0 0.0
    %901 = vmatprep.subr.mxu0 0.0
    %902 = vmatpush1.msra.mxu0 0.0
    %903 = vmatprep.subr.mxu0 0.0
    %904 = vmatpush1.msra.mxu0 0.0
    %905 = vmatprep.subr.mxu0 0.0
    %906 = vmatpush1.msra.mxu0 0.0
    %907 = vmatprep.subr.mxu0 0.0
    %908 = vmatpush1.msra.mxu0 0.0
    %909 = vmatprep.subr.mxu0 0.0
    %910 = vmatpush1.msra.mxu0 0.0
    %911 = vmatprep.subr.mxu0 0.0
    %912 = vmatpush1.msra.mxu0 0.0
    %913 = vmatprep.subr.mxu0 0.0
    %914 = vmatpush1.msra.mxu0 0.0
    %915 = vmatprep.subr.mxu0 0.0
    %916 = vmatpush1.msra.mxu0 0.0
    %917 = vmatprep.subr.mxu0 0.0
    %918 = vmatpush1.msra.mxu0 0.0
    %919 = vmatprep.subr.mxu0 0.0
    %920 = vmatpush1.msra.mxu0 0.0
    %921 = vmatprep.subr.mxu0 0.0
    %922 = vmatpush1.msra.mxu0 0.0
    %923 = vmatprep.mubr.f32.mxu0 0.0
    %v924 = vand.u32 %v33, 4294901760
    %925 = vmatmul.mubr.f32.gmra.mrb[0].mxu0 %v924
    %v926 = vpop.f32.mrb[0].mxu0
    %v927 = vadd.f32 %v855, %v926
    %v928 = vpop.f32.mrb[0].mxu0
    %929 = vdwg.mxu0
    %s930 = scalar_lea.vmem %s2, 16
    %931 = vst [vmem:[%s930 + $0x8] sm:$0xff] %v927
    // Predicated region
    $region14: #{_augment_one.1} parent=1 // pred_check
      _
    $region15: #{_augment_one.1} parent=1 // pred_check_branch
      %933 = sbr.rel (0) target = $region17
    $region16: #{_augment_one.1} parent=1 // pred_region
      _
    $region17: #{_augment_one.1} parent=1 // pred_fallthru
      _
    // Predicated region
    $region18: #{_augment_one.1} parent=1 // pred_check
      _
    $region19: #{_augment_one.1} parent=1 // pred_check_branch
      %935 = sbr.rel (0) target = $region21
    $region20: #{_augment_one.1} parent=1 // pred_region
      _
    $region21: #{_augment_one.1} parent=1 // pred_fallthru
      _
    %936 = vsyncpa [#allocation3], 1

</llo_original>
